<compile_context>
chip_gen: v6e
topology: v6e:2x2x1
jax: 0.10.0
libtpu: 0.0.40
codegen_flags: <defaults>
</compile_context>

<pallas_src>
import jax
import jax.numpy as jnp
from jax.experimental import pallas as pl
from jax.experimental.pallas import tpu as pltpu


def _round_up(n, m):
    return ((n + m - 1) // m) * m


def _make_proto_dist_kernel(single_k: bool, cross_term_bf16: bool):
    mm_dtype = jnp.bfloat16 if cross_term_bf16 else jnp.float32

    def kernel(x_ref, pt_ref, xn_ref, pn_ref, d_ref, dt_ref):
        # x_ref: (tB, tK) latent tile, pt_ref: (tK, tP) prototypes^T tile,
        # xn_ref: (tB, 1) ||x||^2, pn_ref: (1, tP) ||p||^2,
        # d_ref: (tB, tP) dists_to_protos tile, dt_ref: (tP, tB) transposed tile.
        x = x_ref[...].astype(mm_dtype)
        pt = pt_ref[...].astype(mm_dtype)
        partial = jnp.dot(x, pt, preferred_element_type=jnp.float32)

        if single_k:
            # Common case: D fits in one k-step -> no accumulator round trip.
            out = xn_ref[...] + pn_ref[...] - 2.0 * partial
            d_ref[...] = out
            dt_ref[...] = out.T
        else:
            k = pl.program_id(2)

            @pl.when(k == 0)
            def _init():
                d_ref[...] = jnp.zeros_like(d_ref)

            # Output block is resident across the k axis (index_map ignores k),
            # so it doubles as the f32 accumulator.
            d_ref[...] += partial

            @pl.when(k == pl.num_programs(2) - 1)
            def _finalize():
                out = xn_ref[...] + pn_ref[...] - 2.0 * d_ref[...]
                d_ref[...] = out
                dt_ref[...] = out.T

    return kernel


def proto_layer_forward(latent_vectors, prototypes, *, cross_term_bf16=False):
    """Pallas equivalent of ProtoLayer.forward.

    Args:
      latent_vectors: (B, D) float32
      prototypes:     (P, D) float32
    Returns:
      [dists_to_protos (B, P), dists_to_latents (P, B)]
    """
    B, D = latent_vectors.shape
    P, D2 = prototypes.shape
    assert D == D2, "latent_dim mismatch"

    x = latent_vectors.astype(jnp.float32)
    p = prototypes.astype(jnp.float32)

    # Norms precomputed once in the wrapper (one pass over B*D + P*D; the
    # kernel re-reads x / p grid-many times anyway, so this is strictly cheaper
    # than recomputing them per grid step inside the kernel).
    x_norms = jnp.sum(x * x, axis=1, keepdims=True)      # (B, 1)
    p_norms = jnp.sum(p * p, axis=1).reshape(1, -1)      # (1, P)

    # One-time wrapper transpose of the (small) prototype matrix -> MXU-natural
    # RHS layout for the cross term.
    pt = p.T                                             # (D, P)

    # D handling: un-tiled unless large.  When tiled, zero-pad D to the k-tile
    # (zeros don't affect the dot; norms already computed on unpadded arrays).
    if D > 2048:
        tK = 512
        D_pad = _round_up(D, tK)
        if D_pad != D:
            x = jnp.pad(x, ((0, 0), (0, D_pad - D)))
            pt = jnp.pad(pt, ((0, D_pad - D), (0, 0)))
    else:
        tK = D
        D_pad = D
    gk = D_pad // tK

    # Output tiles: 512 when D is small (output-store-bound regime benefits
    # from bigger tiles), 256 otherwise (keeps double-buffered VMEM modest).
    # If B/P are below the cap, use the full extent as the block dim, which
    # satisfies the (8,128) BlockSpec rule without any padding of B or P.
    cap = 512 if D_pad <= 1024 else 256
    tB = B if B <= cap else cap
    tP = P if P <= cap else cap

    gi = pl.cdiv(B, tB)
    gj = pl.cdiv(P, tP)
    grid = (gi, gj, gk)

    kernel = _make_proto_dist_kernel(single_k=(gk == 1),
                                     cross_term_bf16=cross_term_bf16)

    cost = pl.CostEstimate(
        flops=2 * B * P * D + 3 * B * P,
        transcendentals=0,
        bytes_accessed=4 * (B * D_pad * gj + D_pad * P * gi + 2 * B * P + B + P),
    )

    dists_to_protos, dists_to_latents = pl.pallas_call(
        kernel,
        out_shape=(
            jax.ShapeDtypeStruct((B, P), jnp.float32),
            jax.ShapeDtypeStruct((P, B), jnp.float32),
        ),
        grid=grid,
        in_specs=[
            pl.BlockSpec((tB, tK), lambda i, j, k: (i, k)),   # latent tile
            pl.BlockSpec((tK, tP), lambda i, j, k: (k, j)),   # prototypes^T tile
            pl.BlockSpec((tB, 1), lambda i, j, k: (i, 0)),    # ||x||^2 rows
            pl.BlockSpec((1, tP), lambda i, j, k: (0, j)),    # ||p||^2 cols
        ],
        out_specs=(
            pl.BlockSpec((tB, tP), lambda i, j, k: (i, j)),   # dists_to_protos
            pl.BlockSpec((tP, tB), lambda i, j, k: (j, i)),   # dists_to_latents
        ),
        compiler_params=pltpu.CompilerParams(
            # i/j independent -> megacore sharding on v7x (no-op on v5e/v6e);
            # the D-reduction axis (if >1 step) must stay "arbitrary" and last.
            dimension_semantics=("parallel", "parallel", "arbitrary"),
            vmem_limit_bytes=32 * 1024 * 1024,
        ),
        cost_estimate=cost,
    )(x, pt, x_norms, p_norms)

    # NOTE: for problems fitting a single tile, a pure-jnp fallback would skip
    # the pallas_call fixed overhead; intentionally omitted so the kernel path
    # is always exercised.
    return [dists_to_protos, dists_to_latents]


def _reference_forward(latent_vectors, prototypes):
    """Pure-JAX reference mirroring the PyTorch module exactly."""
    def get_norms(x):
        return jnp.sum(jnp.power(x, 2), axis=1)

    features_squared = get_norms(latent_vectors).reshape(-1, 1)
    protos_squared = get_norms(prototypes).reshape(1, -1)
    dists_to_protos = (
        features_squared + protos_squared
        - 2.0 * jnp.matmul(latent_vectors, prototypes.T)
    )
    alt_features_squared = get_norms(latent_vectors).reshape(1, -1)
    alt_protos_squared = get_norms(prototypes).reshape(-1, 1)
    dists_to_latents = (
        alt_features_squared + alt_protos_squared
        - 2.0 * jnp.matmul(prototypes, latent_vectors.T)
    )
    return [dists_to_protos, dists_to_latents]


def _check(B, P, D, key):
    k_latent, k_proto = jax.random.split(key)
    # nn.init.uniform_ -> U[0, 1) prototypes; latent vectors ~ N(0, 1).
    prototypes = jax.random.uniform(k_proto, (P, D), dtype=jnp.float32)
    latent_vectors = jax.random.normal(k_latent, (B, D), dtype=jnp.float32)

    d_xp, d_px = proto_layer_forward(latent_vectors, prototypes)
    jax.block_until_ready(d_xp)
    jax.block_until_ready(d_px)

    ref_xp, ref_px = _reference_forward(latent_vectors, prototypes)
    assert d_xp.shape == (B, P)
    assert d_px.shape == (P, B)
    assert jnp.allclose(d_xp, ref_xp, atol=1e-4, rtol=1e-4)
    assert jnp.allclose(d_px, ref_px, atol=1e-4, rtol=1e-4)


if __name__ == "__main__":
    key = jax.random.PRNGKey(0)
    k1, k2 = jax.random.split(key)

    # Small shapes consistent with the module: batch=8, num_prototypes=16,
    # latent_dim=32 (single-tile path).
    _check(B=8, P=16, D=32, key=k1)

    # Modest multi-tile, ragged-grid shapes (exercise edge-block masking on
    # both B and P without any wrapper-side padding).
    _check(B=600, P=560, D=48, key=k2)

    print("KERNEL_OK")
</pallas_src>

<mosaic_0001>
module attributes {stable_mosaic.version = 11 : i64} {
  func.func @kernel(%arg0: i32, %arg1: i32, %arg2: i32, %arg3: memref<8x32xf32, #tpu.memory_space<vmem>>, %arg4: memref<32x16xf32, #tpu.memory_space<vmem>>, %arg5: memref<8x1xf32, #tpu.memory_space<vmem>>, %arg6: memref<1x16xf32, #tpu.memory_space<vmem>>, %arg7: memref<8x16xf32, #tpu.memory_space<vmem>>, %arg8: memref<16x8xf32, #tpu.memory_space<vmem>>) attributes {dimension_semantics = [#tpu.dimension_semantics<parallel>, #tpu.dimension_semantics<parallel>, #tpu.dimension_semantics<arbitrary>], iteration_bounds = array<i64: 1, 1, 1>, scalar_prefetch = 0 : i64, scratch_operands = 0 : i64, tpu.core_type = #tpu.core_type<tc>, window_params = [{transform_indices = @transform_0, window_bounds = array<i64: 8, 32>}, {transform_indices = @transform_1, window_bounds = array<i64: 32, 16>}, {transform_indices = @transform_2, window_bounds = array<i64: 8, 1>}, {transform_indices = @transform_3, window_bounds = array<i64: 1, 16>}, {transform_indices = @transform_4, window_bounds = array<i64: 8, 16>}, {transform_indices = @transform_5, window_bounds = array<i64: 16, 8>}]} {
    %c0 = arith.constant 0 : index
    %c0_0 = arith.constant 0 : index
    %0 = vector.load %arg3[%c0, %c0_0] : memref<8x32xf32, #tpu.memory_space<vmem>>, vector<8x32xf32>
    %c0_1 = arith.constant 0 : index
    %c0_2 = arith.constant 0 : index
    %1 = vector.load %arg4[%c0_1, %c0_2] : memref<32x16xf32, #tpu.memory_space<vmem>>, vector<32x16xf32>
    %cst = arith.constant dense<0.000000e+00> : vector<8x16xf32>
    %2 = tpu.matmul %0, %1, %cst {dimension_numbers = #tpu.dot_dimension_numbers<[1], [0], [0], [1], [0, 0, 1, 1], [], []>} : vector<8x32xf32>, vector<32x16xf32>, vector<8x16xf32> -> vector<8x16xf32>
    %c0_3 = arith.constant 0 : index
    %c0_4 = arith.constant 0 : index
    %3 = vector.load %arg5[%c0_3, %c0_4] : memref<8x1xf32, #tpu.memory_space<vmem>>, vector<8x1xf32>
    %c0_5 = arith.constant 0 : index
    %c0_6 = arith.constant 0 : index
    %4 = vector.load %arg6[%c0_5, %c0_6] : memref<1x16xf32, #tpu.memory_space<vmem>>, vector<1x16xf32>
    %5 = vector.broadcast %3 : vector<8x1xf32> to vector<8x16xf32>
    %6 = vector.broadcast %4 : vector<1x16xf32> to vector<8x16xf32>
    %7 = arith.addf %5, %6 : vector<8x16xf32>
    %cst_7 = arith.constant 2.000000e+00 : f32
    %8 = vector.broadcast %cst_7 : f32 to vector<8x16xf32>
    %9 = arith.mulf %8, %2 : vector<8x16xf32>
    %10 = arith.subf %7, %9 : vector<8x16xf32>
    %c0_8 = arith.constant 0 : index
    %c0_9 = arith.constant 0 : index
    %11 = vector.load %arg7[%c0_8, %c0_9] : memref<8x16xf32, #tpu.memory_space<vmem>>, vector<8x16xf32>
    tpu.vector_store %arg7[%c0_8, %c0_9], %10 {strides = array<i32>} : memref<8x16xf32, #tpu.memory_space<vmem>>, vector<8x16xf32>,
    %12 = tpu.transpose %10, [1, 0] : vector<8x16xf32> -> vector<16x8xf32>
    %c0_10 = arith.constant 0 : index
    %c0_11 = arith.constant 0 : index
    %13 = vector.load %arg8[%c0_10, %c0_11] : memref<16x8xf32, #tpu.memory_space<vmem>>, vector<16x8xf32>
    tpu.vector_store %arg8[%c0_10, %c0_11], %12 {strides = array<i32>} : memref<16x8xf32, #tpu.memory_space<vmem>>, vector<16x8xf32>,
    return
  }
  func.func @transform_0(%arg0: i32, %arg1: i32, %arg2: i32) -> (i32, i32) {
    %c0_i32 = arith.constant 0 : i32
    return %arg0, %arg2 : i32, i32
  }
  func.func @transform_1(%arg0: i32, %arg1: i32, %arg2: i32) -> (i32, i32) {
    %c0_i32 = arith.constant 0 : i32
    return %arg2, %arg1 : i32, i32
  }
  func.func @transform_2(%arg0: i32, %arg1: i32, %arg2: i32) -> (i32, i32) {
    %c0_i32 = arith.constant 0 : i32
    %c0_i32_0 = arith.constant 0 : i32
    return %arg0, %c0_i32 : i32, i32
  }
  func.func @transform_3(%arg0: i32, %arg1: i32, %arg2: i32) -> (i32, i32) {
    %c0_i32 = arith.constant 0 : i32
    %c0_i32_0 = arith.constant 0 : i32
    return %c0_i32, %arg1 : i32, i32
  }
  func.func @transform_4(%arg0: i32, %arg1: i32, %arg2: i32) -> (i32, i32) {
    %c0_i32 = arith.constant 0 : i32
    return %arg0, %arg1 : i32, i32
  }
  func.func @transform_5(%arg0: i32, %arg1: i32, %arg2: i32) -> (i32, i32) {
    %c0_i32 = arith.constant 0 : i32
    return %arg1, %arg0 : i32, i32
  }
}

</mosaic_0001>

<llo_original>
// kernel: tpu_custom_call.1
$region0: #{tpu_custom_call.1}
  #allocation0 [shape = 'u32[]', space=smem, size = 0x4, offset = 0x4, fixed_abs, tag = 'smem constant byte address 0x4 - core index']
  #allocation1 [shape = 'u32[144,128]{1,0:T(1,128)}', space=vmem, size = 0x12000, scoped, tag = 'internal scratch']
  %s0 = inlined_call_operand.vmem [shape: f32[8,32], index: 0, kind: input, shape index: {}]
  %s1 = inlined_call_operand.vmem [shape: f32[32,16], index: 1, kind: input, shape index: {}]
  %s2 = inlined_call_operand.vmem [shape: f32[8,1], index: 2, kind: input, shape index: {}]
  %s3 = inlined_call_operand.vmem [shape: f32[1,16], index: 3, kind: input, shape index: {}]
  %s4 = inlined_call_operand.hbm [shape: f32[8,16], index: 4, kind: output, shape index: {0}]
  %s5 = inlined_call_operand.vmem [shape: f32[16,8], index: 5, kind: output, shape index: {1}]
  %6 = xla_tuple %s4, %s5
  %s7 = sld [smem:[#allocation0]]
  $region34: #{tpu_custom_call.1} parent=0
    _
  %s9 = ssub.s32 1, %s7
  %s10 = scalar_select 0, %s9, %s7
  $region1: #{tpu_custom_call.1} parent=0
    #allocation2 [shape = 'u8[4096]{0}', space=vmem, size = 0x1000, scoped, tag = 'output window, operand 0, single buffered']
    #allocation3 [shape = 's32[1]{0}', space=sflag, size = 0x4, scoped, tag = 'scoped memory for tpu_custom_call.1']
    %11 = vsyncpa [#allocation3], 0
    // Predicated region
    $region2: #{tpu_custom_call.1} parent=1 // pred_check
      _
    $region3: #{tpu_custom_call.1} parent=1 // pred_check_branch
      %13 = sbr.rel (0) target = $region5
    $region4: #{tpu_custom_call.1} parent=1 // pred_region
      _
    $region5: #{tpu_custom_call.1} parent=1 // pred_fallthru
      _
    // Predicated region
    $region6: #{tpu_custom_call.1} parent=1 // pred_check
      _
    $region7: #{tpu_custom_call.1} parent=1 // pred_check_branch
      %15 = sbr.rel (0) target = $region9
    $region8: #{tpu_custom_call.1} parent=1 // pred_region
      _
    $region9: #{tpu_custom_call.1} parent=1 // pred_fallthru
      _
    // Predicated region
    $region10: #{tpu_custom_call.1} parent=1 // pred_check
      _
    $region11: #{tpu_custom_call.1} parent=1 // pred_check_branch
      %17 = sbr.rel (0) target = $region13
    $region12: #{tpu_custom_call.1} parent=1 // pred_region
      _
    $region13: #{tpu_custom_call.1} parent=1 // pred_fallthru
      _
    // Predicated region
    $region14: #{tpu_custom_call.1} parent=1 // pred_check
      _
    $region15: #{tpu_custom_call.1} parent=1 // pred_check_branch
      %19 = sbr.rel (0) target = $region17
    $region16: #{tpu_custom_call.1} parent=1 // pred_region
      _
    $region17: #{tpu_custom_call.1} parent=1 // pred_fallthru
      _
    %v20 = vld [vmem:[%s0] sm:$0xff]
    %v21 = vld [vmem:[%s1] sm:$0xff]
    %v22 = vld [vmem:[%s1 + $0x8] sm:$0xff]
    %v23 = vld [vmem:[%s1 + $0x10] sm:$0xff]
    %v24 = vld [vmem:[%s1 + $0x18] sm:$0xff]
    %vm25 = vcmask 261120
    %v27 = vsel %vm25, %v20, 0
    %29 = vmatprep.subr.mxu0 0.0
    %30 = vmatpush1.msra.mxu0 0.0
    %31 = vmatprep.subr.mxu0 0.0
    %32 = vmatpush1.msra.mxu0 0.0
    %33 = vmatprep.subr.mxu0 0.0
    %34 = vmatpush1.msra.mxu0 0.0
    %35 = vmatprep.subr.mxu0 0.0
    %36 = vmatpush1.msra.mxu0 0.0
    %37 = vmatprep.subr.mxu0 0.0
    %38 = vmatpush1.msra.mxu0 0.0
    %39 = vmatprep.subr.mxu0 0.0
    %40 = vmatpush1.msra.mxu0 0.0
    %41 = vmatprep.subr.mxu0 0.0
    %42 = vmatpush1.msra.mxu0 0.0
    %43 = vmatprep.subr.mxu0 0.0
    %44 = vmatpush1.msra.mxu0 0.0
    %45 = vmatprep.subr.mxu0 0.0
    %46 = vmatpush1.msra.mxu0 0.0
    %47 = vmatprep.subr.mxu0 0.0
    %48 = vmatpush1.msra.mxu0 0.0
    %49 = vmatprep.subr.mxu0 0.0
    %50 = vmatpush1.msra.mxu0 0.0
    %51 = vmatprep.subr.mxu0 0.0
    %52 = vmatpush1.msra.mxu0 0.0
    %53 = vmatprep.subr.mxu0 0.0
    %54 = vmatpush1.msra.mxu0 %v24
    %55 = vmatprep.subr.mxu0 0.0
    %56 = vmatpush1.msra.mxu0 %v23
    %57 = vmatprep.subr.mxu0 0.0
    %58 = vmatpush1.msra.mxu0 %v22
    %59 = vmatprep.subr.mxu0 0.0
    %60 = vmatpush1.msra.mxu0 %v21
    %61 = vmatprep.subr.mxu0 0.0
    %62 = vmatpush2.msra.mxu0 0.0
    %63 = vmatprep.subr.mxu0 0.0
    %64 = vmatpush2.msra.mxu0 0.0
    %65 = vmatprep.subr.mxu0 0.0
    %66 = vmatpush2.msra.mxu0 0.0
    %67 = vmatprep.subr.mxu0 0.0
    %68 = vmatpush2.msra.mxu0 0.0
    %69 = vmatprep.subr.mxu0 0.0
    %70 = vmatpush2.msra.mxu0 0.0
    %71 = vmatprep.subr.mxu0 0.0
    %72 = vmatpush2.msra.mxu0 0.0
    %73 = vmatprep.subr.mxu0 0.0
    %74 = vmatpush2.msra.mxu0 0.0
    %75 = vmatprep.subr.mxu0 0.0
    %76 = vmatpush2.msra.mxu0 0.0
    %77 = vmatprep.subr.mxu0 0.0
    %78 = vmatpush2.msra.mxu0 0.0
    %79 = vmatprep.subr.mxu0 0.0
    %80 = vmatpush2.msra.mxu0 0.0
    %81 = vmatprep.subr.mxu0 0.0
    %82 = vmatpush2.msra.mxu0 0.0
    %83 = vmatprep.subr.mxu0 0.0
    %84 = vmatpush2.msra.mxu0 0.0
    %85 = vmatprep.subr.mxu0 0.0
    %86 = vmatpush2.msra.mxu0 0.0
    %87 = vmatprep.subr.mxu0 0.0
    %88 = vmatpush2.msra.mxu0 0.0
    %89 = vmatprep.subr.mxu0 0.0
    %90 = vmatpush2.msra.mxu0 0.0
    %91 = vmatprep.subr.mxu0 0.0
    %92 = vmatpush2.msra.mxu0 0.0
    %93 = vmatprep.mubr.f32.mxu0 0.0
    %94 = vmatmul.mubr.f32.gmra.mxu0 %v27
    %v95 = vpop.f32.mrf.mxu0
    %v96 = vadd.f32 0.0, %v95
    %v97 = vpop.f32.mrf.mxu0
    %98 = vdwg.mxu0
    %v99 = vld [vmem:[%s2] sm:$0xff]
    %v100 = vld [vmem:[%s3] sm:$0x1]
    %102 = vset.pattern.permute.xlu0 0
    %103 = vperm.xlu0 %102, %v99
    %v104 = vpop.permute.xlu0 %103
    %v107 = vlaneseq
    %v108 = vshrl.u32 %v107, 7
    %v109 = vsub.s32 0, %v108
    %v110 = vrot.slane %v100, %v109
    %v112 = vadd.f32 %v104, %v110
    %v113 = vmul.f32 %v96, 2.0
    %v114 = vsub.f32 %v112, %v113
    %vm115 = vcmask 130048
    %116 = vst.msk [vmem:[#allocation2] sm:$0xff] %vm115, %v114
    %117 = vxpose.xlu0.b32.start [1/16] %v114, 128
    %118 = vxpose.xlu0.b32.cont [2/16] 0.0, 128
    %119 = vxpose.xlu0.b32.cont [3/16] 0.0, 128
    %120 = vxpose.xlu0.b32.cont [4/16] 0.0, 128
    %121 = vxpose.xlu0.b32.cont [5/16] 0.0, 128
    %122 = vxpose.xlu0.b32.cont [6/16] 0.0, 128
    %123 = vxpose.xlu0.b32.cont [7/16] 0.0, 128
    %124 = vxpose.xlu0.b32.cont [8/16] 0.0, 128
    %125 = vxpose.xlu0.b32.cont [9/16] 0.0, 128
    %126 = vxpose.xlu0.b32.cont [10/16] 0.0, 128
    %127 = vxpose.xlu0.b32.cont [11/16] 0.0, 128
    %128 = vxpose.xlu0.b32.cont [12/16] 0.0, 128
    %129 = vxpose.xlu0.b32.cont [13/16] 0.0, 128
    %130 = vxpose.xlu0.b32.cont [14/16] 0.0, 128
    %131 = vxpose.xlu0.b32.cont [15/16] 0.0, 128
    %132 = vxpose.xlu0.b32.end [16/16] 0.0, 128
    %v133 = vpop.trf.xlu0
    %v134 = vpop.trf.xlu0
    %v135 = vpop.trf.xlu0
    %v136 = vpop.trf.xlu0
    %v137 = vpop.trf.xlu0
    %v138 = vpop.trf.xlu0
    %v139 = vpop.trf.xlu0
    %v140 = vpop.trf.xlu0
    %v141 = vpop.trf.xlu0
    %v142 = vpop.trf.xlu0
    %v143 = vpop.trf.xlu0
    %v144 = vpop.trf.xlu0
    %v145 = vpop.trf.xlu0
    %v146 = vpop.trf.xlu0
    %v147 = vpop.trf.xlu0
    %v148 = vpop.trf.xlu0
    %vm149 = vcmask 64512
    %150 = vst.msk [vmem:[%s5] sm:$0xff] %vm149, %v133
    %151 = vst.msk [vmem:[%s5 + $0x8] sm:$0xff] %vm149, %v134
    // Predicated region
    $region18: #{tpu_custom_call.1} parent=1 // pred_check
      _
    $region19: #{tpu_custom_call.1} parent=1 // pred_check_branch
      %153 = sbr.rel (0) target = $region21
    $region20: #{tpu_custom_call.1} parent=1 // pred_region
      %s155 = ssub.s32 128, 128
      %156 = vsyncadd [#allocation3], %s155
      %s158 = sshll.u32 [#allocation2], 4
      %s159 = int_to_ptr.vmem [resolvable:$true] %s158
      %161 = dma.vmem_to_hbm [thread:$0]  %s159, 128, %s4, [#allocation3]
    $region21: #{tpu_custom_call.1} parent=1 // pred_fallthru
      _
    // Predicated region
    $region22: #{tpu_custom_call.1} parent=1 // pred_check
      _
    $region23: #{tpu_custom_call.1} parent=1 // pred_check_branch
      %163 = sbr.rel (0) target = $region25
    $region24: #{tpu_custom_call.1} parent=1 // pred_region
      _
    $region25: #{tpu_custom_call.1} parent=1 // pred_fallthru
      _
    // Predicated region
    $region26: #{tpu_custom_call.1} parent=1 // pred_check
      _
    $region27: #{tpu_custom_call.1} parent=1 // pred_check_branch
      %165 = sbr.rel (0) target = $region29
    $region28: #{tpu_custom_call.1} parent=1 // pred_region
      %166 = dma.done [#allocation3], 128
    $region29: #{tpu_custom_call.1} parent=1 // pred_fallthru
      _
    // Predicated region
    $region30: #{tpu_custom_call.1} parent=1 // pred_check
      _
    $region31: #{tpu_custom_call.1} parent=1 // pred_check_branch
      %168 = sbr.rel (0) target = $region33
    $region32: #{tpu_custom_call.1} parent=1 // pred_region
      _
    $region33: #{tpu_custom_call.1} parent=1 // pred_fallthru
      _
    %169 = vsyncpa [#allocation3], 1

</llo_original>
